<compile_context>
chip_gen: v7x
topology: tpu7x:2x2x1
jax: 0.10.0
libtpu: 0.0.40
codegen_flags: <defaults>
</compile_context>

<pallas_src>
import functools

import jax
import jax.numpy as jnp
from jax.experimental import pallas as pl
from jax.experimental.pallas import tpu as pltpu

SMEM = pltpu.MemorySpace.SMEM

# Production row-tile target (review: 512-1024 rows ~= 85% of HBM roofline on
# v6e; halve for v7x's 64 MiB VMEM).  The demo in __main__ passes a smaller
# value so multi-tile grids are actually exercised at toy shapes.
ROW_TILE_DEFAULT = 512


def _pick_row_tile(n_rows, target, multiple=16):
    """Largest multiple-of-16 divisor of n_rows that is <= target (else whole)."""
    if n_rows <= target:
        return n_rows
    t = (target // multiple) * multiple
    while t >= multiple:
        if n_rows % t == 0:
            return t
        t -= multiple
    return n_rows


def _rowtiled(tm, ncols):
    return pl.BlockSpec((tm, ncols), lambda r: (r, 0))


def _whole2d(shape):
    return pl.BlockSpec(shape, lambda r: (0, 0))


def _parallel1():
    return pltpu.CompilerParams(dimension_semantics=("parallel",))


# ----------------------------- Pallas kernels ------------------------------

def _rownorm_kernel(x_ref, o_ref):
    # row-wise L2 normalization (build_sim prologue)
    x = x_ref[...]
    o_ref[...] = x * jax.lax.rsqrt(jnp.sum(x * x, axis=-1, keepdims=True) + 1e-12)


def _linear_kernel(x_ref, wt_ref, b_ref, o_ref):
    # o = x @ W^T + b   (wt pre-transposed to [Din, Dout]; b is [1, Dout])
    o_ref[...] = (jnp.dot(x_ref[...], wt_ref[...],
                          preferred_element_type=jnp.float32) + b_ref[...])


def _spmm_kernel(adj_ref, x_ref, o_ref):
    # o_tile = adj_tile @ x   (adj streamed as bf16 row tiles, f32 accumulation)
    o_ref[...] = jnp.dot(adj_ref[...], x_ref[...],
                         preferred_element_type=jnp.float32)


def _propagate_lrelu_kernel(adj_ref, z_ref, o_ref, *, slope):
    # o_tile = leaky_relu(item_adj_tile @ z)  -- z precomputed once per layer
    y = jnp.dot(adj_ref[...], z_ref[...], preferred_element_type=jnp.float32)
    o_ref[...] = jnp.where(y >= 0.0, y, slope * y)


def _modal_attn_kernel(itm_ref, img_raw_ref, txt_raw_ref,
                       wimgt_ref, bimg_ref, wtxtt_ref, btxt_ref,
                       wqkv_ref, bqkv_ref, wkv_ref, bkv_ref,
                       o_ref, *, scale, d):
    # Fused: image_trs / text_trs projections + single-head scaled dot-product
    # attention with query = item embedding and keys/values = [image, text, item].
    # QKV weights are fused: [Wq|Wk|Wv] (D,3D) for the item, [Wk|Wv] (D,2D) for
    # image/text -> 3 projection matmuls instead of 7.
    itm = itm_ref[...]
    img = (jnp.dot(img_raw_ref[...], wimgt_ref[...],
                   preferred_element_type=jnp.float32) + bimg_ref[...])
    txt = (jnp.dot(txt_raw_ref[...], wtxtt_ref[...],
                   preferred_element_type=jnp.float32) + btxt_ref[...])

    qkv_i = (jnp.dot(itm, wqkv_ref[...],
                     preferred_element_type=jnp.float32) + bqkv_ref[...])
    q, k2, v2 = qkv_i[:, 0:d], qkv_i[:, d:2 * d], qkv_i[:, 2 * d:3 * d]

    kv0 = (jnp.dot(img, wkv_ref[...],
                   preferred_element_type=jnp.float32) + bkv_ref[...])
    kv1 = (jnp.dot(txt, wkv_ref[...],
                   preferred_element_type=jnp.float32) + bkv_ref[...])
    k0, v0 = kv0[:, 0:d], kv0[:, d:2 * d]
    k1, v1 = kv1[:, 0:d], kv1[:, d:2 * d]

    s0 = jnp.sum(q * k0, axis=-1, keepdims=True) * scale
    s1 = jnp.sum(q * k1, axis=-1, keepdims=True) * scale
    s2 = jnp.sum(q * k2, axis=-1, keepdims=True) * scale
    m = jnp.maximum(jnp.maximum(s0, s1), s2)
    e0, e1, e2 = jnp.exp(s0 - m), jnp.exp(s1 - m), jnp.exp(s2 - m)
    inv = pl.reciprocal(e0 + e1 + e2, approx=False)
    # TODO(synk): AttnLayer source unavailable; attention-weight dropout (0.2)
    # is a no-op in eval mode and is omitted.
    o_ref[...] = (e0 * v0 + e1 * v1 + e2 * v2) * inv


def _sim_topk_kernel(xr_ref, xf_ref, sim_ref, rsum_ref, *, topk):
    # Fused build_sim + build_neighbourhood: cosine-sim row tile, per-row top-k
    # threshold mask (instead of a scatter), masked sim + row sum written once.
    xr = xr_ref[...]                      # (tm, D) row-normalized
    xf = xf_ref[...]                      # (N, D)  row-normalized
    sim = jax.lax.dot_general(xr, xf, (((1,), (1,)), ((), ())),
                              preferred_element_type=jnp.float32)   # (tm, N)
    # k-th largest per row via iterative max (topk small & static).
    # TODO(synk): ties are kept by threshold (>= kth) instead of exact-k scatter.
    cur = sim
    kth = jnp.max(cur, axis=-1, keepdims=True)
    for _ in range(topk - 1):
        cur = jnp.where(cur >= kth, -jnp.inf, cur)
        kth = jnp.max(cur, axis=-1, keepdims=True)
    masked = jnp.where(sim >= kth, sim, 0.0)
    sim_ref[...] = masked
    rsum_ref[...] = jnp.sum(masked, axis=-1, keepdims=True)


def _blend_adj_kernel(masked_ref, dinv_r_ref, dinv_c_ref, img_ref, txt_ref,
                      w_ref, o_ref, *, lam):
    # Fused normalized-Laplacian scaling of the learned adj + modal-weight blend
    # of the original adjs + lambda mix; emits item_adj directly (bf16 output).
    learned = masked_ref[...] * dinv_r_ref[...] * dinv_c_ref[...]
    orig = w_ref[0] * img_ref[...] + w_ref[1] * txt_ref[...]
    o_ref[...] = ((1.0 - lam) * learned + lam * orig).astype(o_ref.dtype)


# ----------------------------- kernel wrappers ------------------------------

def pallas_row_normalize(x, row_tile=ROW_TILE_DEFAULT):
    n, d = x.shape
    tm = _pick_row_tile(n, row_tile)
    return pl.pallas_call(
        _rownorm_kernel,
        grid=(n // tm,),
        in_specs=[_rowtiled(tm, d)],
        out_specs=_rowtiled(tm, d),
        out_shape=jax.ShapeDtypeStruct((n, d), jnp.float32),
        compiler_params=_parallel1(),
    )(x)


def pallas_linear(x, w, b, row_tile=ROW_TILE_DEFAULT):
    # x: (N, Din), w: (Dout, Din), b: (Dout,)
    n, din = x.shape
    dout = w.shape[0]
    tm = _pick_row_tile(n, row_tile)
    return pl.pallas_call(
        _linear_kernel,
        grid=(n // tm,),
        in_specs=[_rowtiled(tm, din), _whole2d((din, dout)), _whole2d((1, dout))],
        out_specs=_rowtiled(tm, dout),
        out_shape=jax.ShapeDtypeStruct((n, dout), jnp.float32),
        compiler_params=_parallel1(),
    )(x, w.T, b.reshape(1, -1))


def pallas_spmm(adj_bf16, x, row_tile=ROW_TILE_DEFAULT):
    # (dense stand-in for torch.sparse.mm(adj, ego)); adj streamed bf16 row tiles.
    m, k = adj_bf16.shape
    d = x.shape[1]
    tm = _pick_row_tile(m, row_tile)
    x_bf16 = x.astype(jnp.bfloat16)
    ce = pl.CostEstimate(flops=int(2.0 * m * k * d), transcendentals=0,
                         bytes_accessed=int(2.0 * m * k + 2.0 * k * d + 4.0 * m * d))
    return pl.pallas_call(
        _spmm_kernel,
        grid=(m // tm,),
        in_specs=[_rowtiled(tm, k), _whole2d((k, d))],
        out_specs=_rowtiled(tm, d),
        out_shape=jax.ShapeDtypeStruct((m, d), jnp.float32),
        compiler_params=_parallel1(),
        cost_estimate=ce,
    )(adj_bf16, x_bf16)


def pallas_graph_propagate(item_adj_bf16, z, slope, row_tile=ROW_TILE_DEFAULT):
    m, k = item_adj_bf16.shape
    d = z.shape[1]
    tm = _pick_row_tile(m, row_tile)
    z_bf16 = z.astype(jnp.bfloat16)
    ce = pl.CostEstimate(flops=int(2.0 * m * k * d), transcendentals=0,
                         bytes_accessed=int(2.0 * m * k + 2.0 * k * d + 4.0 * m * d))
    return pl.pallas_call(
        functools.partial(_propagate_lrelu_kernel, slope=slope),
        grid=(m // tm,),
        in_specs=[_rowtiled(tm, k), _whole2d((k, d))],
        out_specs=_rowtiled(tm, d),
        out_shape=jax.ShapeDtypeStruct((m, d), jnp.float32),
        compiler_params=_parallel1(),
        cost_estimate=ce,
    )(item_adj_bf16, z_bf16)


def pallas_modal_attention(item_emb, image_raw, text_raw, params,
                           row_tile=ROW_TILE_DEFAULT):
    n, d = item_emb.shape
    di, dt = image_raw.shape[1], text_raw.shape[1]
    # fuse QKV weights once (tiny XLA concats of 32x32 matrices)
    wqkv_t = jnp.concatenate([params["wq"].T, params["wk"].T, params["wv"].T], axis=1)
    bqkv = jnp.concatenate([params["bq"], params["bk"], params["bv"]]).reshape(1, 3 * d)
    wkv_t = jnp.concatenate([params["wk"].T, params["wv"].T], axis=1)
    bkv = jnp.concatenate([params["bk"], params["bv"]]).reshape(1, 2 * d)
    wimg_t = params["image_trs_w"].T
    bimg = params["image_trs_b"].reshape(1, -1)
    wtxt_t = params["text_trs_w"].T
    btxt = params["text_trs_b"].reshape(1, -1)

    tm = _pick_row_tile(n, row_tile)
    scale = 1.0 / float(d) ** 0.5
    return pl.pallas_call(
        functools.partial(_modal_attn_kernel, scale=scale, d=d),
        grid=(n // tm,),
        in_specs=[
            _rowtiled(tm, d),            # item embedding tile
            _rowtiled(tm, di),           # raw image features tile
            _rowtiled(tm, dt),           # raw text features tile
            _whole2d((di, d)), _whole2d((1, d)),      # image_trs
            _whole2d((dt, d)), _whole2d((1, d)),      # text_trs
            _whole2d((d, 3 * d)), _whole2d((1, 3 * d)),   # fused Wq|Wk|Wv
            _whole2d((d, 2 * d)), _whole2d((1, 2 * d)),   # fused Wk|Wv
        ],
        out_specs=_rowtiled(tm, d),
        out_shape=jax.ShapeDtypeStruct((n, d), jnp.float32),
        compiler_params=_parallel1(),
    )(item_emb, image_raw, text_raw, wimg_t, bimg, wtxt_t, btxt,
      wqkv_t, bqkv, wkv_t, bkv)


def pallas_sim_topk(xn, topk, row_tile=ROW_TILE_DEFAULT):
    # xn: row-normalized features (N, D).  Whole xn stays in VMEM (N x 32).
    n, d = xn.shape
    tm = _pick_row_tile(n, row_tile)
    ce = pl.CostEstimate(flops=int(2.0 * n * n * d + 3.0 * topk * n * n),
                         transcendentals=0,
                         bytes_accessed=int(4.0 * (2 * n * d + n * n + n)))
    return pl.pallas_call(
        functools.partial(_sim_topk_kernel, topk=topk),
        grid=(n // tm,),
        in_specs=[_rowtiled(tm, d), _whole2d((n, d))],
        out_specs=(_rowtiled(tm, n), _rowtiled(tm, 1)),
        out_shape=(jax.ShapeDtypeStruct((n, n), jnp.float32),
                   jax.ShapeDtypeStruct((n, 1), jnp.float32)),
        compiler_params=_parallel1(),
        cost_estimate=ce,
    )(xn, xn)


def pallas_blend_item_adj(masked_sim, dinv, image_adj, text_adj, w, lam,
                          row_tile=ROW_TILE_DEFAULT, out_dtype=jnp.bfloat16):
    n = masked_sim.shape[0]
    tm = _pick_row_tile(n, row_tile)
    dinv_row = dinv.reshape(n, 1)
    dinv_col = dinv.reshape(1, n)
    ce = pl.CostEstimate(flops=int(6.0 * n * n), transcendentals=0,
                         bytes_accessed=int(12.0 * n * n + 2.0 * n * n))
    return pl.pallas_call(
        functools.partial(_blend_adj_kernel, lam=float(lam)),
        grid=(n // tm,),
        in_specs=[
            _rowtiled(tm, n),            # masked learned similarities
            _rowtiled(tm, 1),            # d^-1/2 (row factor)
            _whole2d((1, n)),            # d^-1/2 (column factor)
            _rowtiled(tm, n),            # image_original_adj
            _rowtiled(tm, n),            # text_original_adj
            pl.BlockSpec(memory_space=SMEM),    # softmax(modal_weight), shape (2,)
        ],
        out_specs=_rowtiled(tm, n),
        out_shape=jax.ShapeDtypeStruct((n, n), out_dtype),
        compiler_params=_parallel1(),
        cost_estimate=ce,
    )(masked_sim, dinv_row, dinv_col, image_adj, text_adj, w)


# --------------------------------- glue -------------------------------------

def build_original_adj(feats_raw, topk, row_tile=ROW_TILE_DEFAULT):
    """Init-time: build_sim -> build_neighbourhood -> normalized Laplacian."""
    xn = pallas_row_normalize(feats_raw, row_tile=row_tile)
    masked, rowsum = pallas_sim_topk(xn, topk, row_tile=row_tile)
    dinv = jnp.where(rowsum > 0, jax.lax.rsqrt(jnp.maximum(rowsum, 1e-12)), 0.0)
    return masked * dinv * dinv.reshape(1, -1)


def compute_normalized_laplacian(adj):
    rowsum = jnp.sum(adj, axis=-1)
    d_inv_sqrt = jnp.where(rowsum > 0, rowsum ** -0.5, 0.0)
    return adj * d_inv_sqrt[:, None] * d_inv_sqrt[None, :]


# TODO(synk): PCALoss is not defined in the reference source; stand-in is the
# top-k PCA reconstruction residual (sum of discarded covariance eigenvalues).
def pca_loss(x, k):
    xc = x - jnp.mean(x, axis=0, keepdims=True)
    cov = (xc.T @ xc) / x.shape[0]
    eigvals = jnp.linalg.eigh(cov)[0]           # ascending
    k = min(k, x.shape[1])
    return jnp.sum(eigvals[: x.shape[1] - k])


def l2_normalize(x, eps=1e-12):
    nrm = jnp.sqrt(jnp.sum(x * x, axis=1, keepdims=True))
    return x / jnp.maximum(nrm, eps)


# ------------------------------- config (args) ------------------------------

class Args:
    cf_model = "lightgcn"
    n_layers = 2          # item-graph propagation layers
    lambda_coeff = 0.9
    feat_embed_dim = 32
    topk = 4


ARGS = Args()


# ---------------------------- parameter init --------------------------------

def xavier_uniform(key, shape):
    fan_out, fan_in = shape
    limit = (6.0 / (fan_in + fan_out)) ** 0.5
    return jax.random.uniform(key, shape, jnp.float32, -limit, limit)


def init_params(key, n_users, n_items, embedding_dim, image_dim, text_dim,
                feat_embed_dim):
    assert feat_embed_dim == embedding_dim  # required by the attention concat
    ks = jax.random.split(key, 12)
    return {
        "user_emb": xavier_uniform(ks[0], (n_users, embedding_dim)),
        "item_emb": xavier_uniform(ks[1], (n_items, embedding_dim)),
        "linearW_w": xavier_uniform(ks[2], (embedding_dim, embedding_dim)),
        "linearW_b": jnp.zeros((embedding_dim,), jnp.float32),
        "wq": xavier_uniform(ks[3], (embedding_dim, embedding_dim)),
        "wk": xavier_uniform(ks[4], (embedding_dim, embedding_dim)),
        "wv": xavier_uniform(ks[5], (embedding_dim, embedding_dim)),
        "bq": jnp.zeros((embedding_dim,), jnp.float32),
        "bk": jnp.zeros((embedding_dim,), jnp.float32),
        "bv": jnp.zeros((embedding_dim,), jnp.float32),
        "image_trs_w": xavier_uniform(ks[6], (feat_embed_dim, image_dim)),
        "image_trs_b": jnp.zeros((feat_embed_dim,), jnp.float32),
        "text_trs_w": xavier_uniform(ks[7], (feat_embed_dim, text_dim)),
        "text_trs_b": jnp.zeros((feat_embed_dim,), jnp.float32),
        "modal_weight": jnp.array([0.5, 0.5], jnp.float32),
        # pretrained modality features (nn.Embedding.from_pretrained weights)
        "image_feats": jax.random.normal(ks[8], (n_items, image_dim), jnp.float32),
        "text_feats": jax.random.normal(ks[9], (n_items, text_dim), jnp.float32),
    }


# -------------------------------- forward -----------------------------------

def redgl_forward(params, adj_bf16, *, n_users, n_items, n_ui_layers, args,
                  image_original_adj, text_original_adj,
                  negative_slope=0.1, build_item_graph=True,
                  row_tile=ROW_TILE_DEFAULT):
    del build_item_graph  # TODO(synk): cached/detached item_adj path is stateful;
    #                       this stateless forward always rebuilds the item graph.
    user_emb = params["user_emb"]
    item_emb = params["item_emb"]

    loss = pca_loss(user_emb, 2) + pca_loss(item_emb, 2)

    # fused modality projections + QKV attention (row-tiled over items)
    feats = pallas_modal_attention(item_emb, params["image_feats"],
                                   params["text_feats"], params,
                                   row_tile=row_tile)

    # item-item graph: fused sim/top-k kernel + fused Laplacian/blend kernel
    w = jax.nn.softmax(params["modal_weight"], axis=0)
    xn = pallas_row_normalize(feats, row_tile=row_tile)
    masked_sim, rowsum = pallas_sim_topk(xn, args.topk, row_tile=row_tile)
    dinv = jnp.where(rowsum > 0, jax.lax.rsqrt(jnp.maximum(rowsum, 1e-12)), 0.0)
    item_adj = pallas_blend_item_adj(masked_sim, dinv,
                                     image_original_adj, text_original_adj,
                                     w, args.lambda_coeff,
                                     row_tile=row_tile)   # bf16, streamed below

    # h = leaky_relu(item_adj @ linearW(h)), n_layers times
    h = feats
    for _ in range(args.n_layers):
        z = pallas_linear(h, params["linearW_w"], params["linearW_b"],
                          row_tile=row_tile)
        h = pallas_graph_propagate(item_adj, z, negative_slope, row_tile=row_tile)
    loss = loss + pca_loss(h, 128)

    # lightgcn collaborative-filtering branch
    # TODO(synk): torch.sparse.mm(adj, ego) executed as a dense row-tiled
    # Pallas matmul streaming adj in bf16 (f32 accumulation).
    ego = jnp.concatenate([user_emb, item_emb], axis=0)
    all_emb = [ego]
    for _ in range(n_ui_layers):
        ego = pallas_spmm(adj_bf16, ego, row_tile=row_tile)
        all_emb.append(ego)
    all_emb = jnp.mean(jnp.stack(all_emb, axis=1), axis=1)

    u_g = all_emb[:n_users]
    i_g = all_emb[n_users:] + l2_normalize(h)
    return u_g, i_g, loss


# --------------------------------- main --------------------------------------

if __name__ == "__main__":
    n_users, n_items = 32, 96
    embedding_dim = 32
    image_dim, text_dim = 64, 48
    weight_size = [32, 32]
    n_ui_layers = len(weight_size)
    # small tile so the demo exercises multi-tile grids; use 512-1024 in prod.
    row_tile = 32

    key = jax.random.PRNGKey(0)
    pkey, akey = jax.random.split(key)
    params = init_params(pkey, n_users, n_items, embedding_dim,
                         image_dim, text_dim, ARGS.feat_embed_dim)

    # modality adjacency matrices built in __init__ from raw features
    image_adj = build_original_adj(params["image_feats"], ARGS.topk, row_tile)
    text_adj = build_original_adj(params["text_feats"], ARGS.topk, row_tile)

    # normalized user-item bipartite adjacency (dense stand-in for the sparse adj)
    R = (jax.random.uniform(akey, (n_users, n_items)) < 0.3).astype(jnp.float32)
    A = jnp.zeros((n_users + n_items, n_users + n_items), jnp.float32)
    A = A.at[:n_users, n_users:].set(R)
    A = A.at[n_users:, :n_users].set(R.T)
    adj = compute_normalized_laplacian(A)
    adj_bf16 = adj.astype(jnp.bfloat16)   # streamed operand of the LightGCN matmuls

    u_g, i_g, loss = redgl_forward(
        params, adj_bf16, n_users=n_users, n_items=n_items,
        n_ui_layers=n_ui_layers, args=ARGS,
        image_original_adj=image_adj, text_original_adj=text_adj,
        row_tile=row_tile)

    (u_g, i_g, loss) = jax.block_until_ready((u_g, i_g, loss))
    assert u_g.shape == (n_users, embedding_dim)
    assert i_g.shape == (n_items, embedding_dim)
    assert bool(jnp.isfinite(u_g).all()) and bool(jnp.isfinite(i_g).all())
    assert bool(jnp.isfinite(loss))
    print("KERNEL_OK")
</pallas_src>

<mosaic_0001>
module attributes {stable_mosaic.version = 11 : i64} {
  func.func @_rownorm_kernel(%arg0: i32, %arg1: memref<32x64xf32, #tpu.memory_space<vmem>>, %arg2: memref<32x64xf32, #tpu.memory_space<vmem>>) attributes {dimension_semantics = [#tpu.dimension_semantics<parallel>], iteration_bounds = array<i64: 3>, scalar_prefetch = 0 : i64, scratch_operands = 0 : i64, tpu.core_type = #tpu.core_type<tc>, window_params = [{transform_indices = @transform_0, window_bounds = array<i64: 32, 64>}, {transform_indices = @transform_1, window_bounds = array<i64: 32, 64>}]} {
    %c0 = arith.constant 0 : index
    %c0_0 = arith.constant 0 : index
    %0 = vector.load %arg1[%c0, %c0_0] : memref<32x64xf32, #tpu.memory_space<vmem>>, vector<32x64xf32>
    %1 = arith.mulf %0, %0 : vector<32x64xf32>
    %cst = arith.constant dense<0.000000e+00> : vector<32xf32>
    %2 = vector.multi_reduction <add>, %1, %cst [1] : vector<32x64xf32> to vector<32xf32>
    %3 = vector.shape_cast %2 : vector<32xf32> to vector<32x1xf32>
    %cst_1 = arith.constant 9.99999996E-13 : f32
    %4 = vector.broadcast %cst_1 : f32 to vector<32x1xf32>
    %5 = arith.addf %3, %4 : vector<32x1xf32>
    %6 = math.rsqrt %5 : vector<32x1xf32>
    %7 = vector.broadcast %6 : vector<32x1xf32> to vector<32x64xf32>
    %8 = arith.mulf %0, %7 : vector<32x64xf32>
    %c0_2 = arith.constant 0 : index
    %c0_3 = arith.constant 0 : index
    %9 = vector.load %arg2[%c0_2, %c0_3] : memref<32x64xf32, #tpu.memory_space<vmem>>, vector<32x64xf32>
    tpu.vector_store %arg2[%c0_2, %c0_3], %8 {strides = array<i32>} : memref<32x64xf32, #tpu.memory_space<vmem>>, vector<32x64xf32>,
    return
  }
  func.func @transform_0(%arg0: i32) -> (i32, i32) {
    %c0_i32 = arith.constant 0 : i32
    %c0_i32_0 = arith.constant 0 : i32
    return %arg0, %c0_i32 : i32, i32
  }
  func.func @transform_1(%arg0: i32) -> (i32, i32) {
    %c0_i32 = arith.constant 0 : i32
    %c0_i32_0 = arith.constant 0 : i32
    return %arg0, %c0_i32 : i32, i32
  }
}

</mosaic_0001>

<llo_original>
// kernel: tpu_custom_call.1
$region0: #{tpu_custom_call.1}
  #allocation0 [shape = 'u32[]', space=smem, size = 0x4, offset = 0x4, fixed_abs, tag = 'smem constant byte address 0x4 - core index']
  #allocation1 [shape = 'u32[144,128]{1,0:T(1,128)}', space=vmem, size = 0x12000, scoped, tag = 'internal scratch']
  %s0 = inlined_call_operand.vmem [shape: f32[96,64], index: 0, kind: input, shape index: {}]
  %s1 = inlined_call_operand.vmem [shape: f32[96,64], index: 1, kind: output, shape index: {}]
  %s2 = sld [smem:[#allocation0]]
  $region37: #{tpu_custom_call.1} parent=0
    _
  %s4 = ssub.s32 1, %s2
  %s5 = scalar_select 0, %s4, %s2
  loop: start=0, step=1, limit=5
  $region2: #{tpu_custom_call.1} parent=0 // loop_pre_header
    _
  $region3: #{tpu_custom_call.1} parent=0 // loop_header
    %s7 = sphi 0, %s11
    %p8 = scmp.ge.s32.totalorder %s7, 5
    %s17 = sphi 0, %s19
    %s20 = sphi 0, %s17
    %s21 = sphi 0, %s20
    %s37 = sphi 0, %s21
    %s43 = sphi 0, %s45
    %s46 = sphi 0, %s43
    %s47 = sphi 0, %s46
    %s63 = sphi 0, %s47
  $region4: #{tpu_custom_call.1} parent=0 // loop_header_branch
    %10 = sbr.rel (%p8) target = $region8
  $region5: #{tpu_custom_call.1} parent=0 // loop_body
    %s12 = ssub.s32 %s7, 1
    %s13 = ssub.s32 %s7, 2
    %s14 = sadd.s32 %s7, 1
    %s15 = ssub.s32 %s7, %s14
    %p16 = scmp.eq.s32.totalorder %s15, 0
    %s18 = sadd.s32 %s17, 1
    %s19 = scalar_select %p16, %s17, %s18
    %p22 = pneg %p16
    %p23 = scmp.eq.s32.totalorder %s7, 2
    %p24 = por %p22, %p23
    %p25 = scmp.ne.s32.totalorder %s17, %s20
    %p26 = scmp.eq.s32.totalorder %s7, 0
    %p27 = por %p25, %p26
    %p28 = scmp.ne.s32.totalorder %s17, %s20
    %p29 = scmp.eq.s32.totalorder %s12, 2
    %p30 = por %p28, %p29
    %p31 = scmp.ne.s32.totalorder %s20, %s21
    %p32 = scmp.eq.s32.totalorder %s12, 0
    %p33 = por %p31, %p32
    %p34 = scmp.ne.s32.totalorder %s20, %s21
    %p35 = scmp.eq.s32.totalorder %s13, 2
    %p36 = por %p34, %p35
    %p38 = scmp.ne.s32.totalorder %s21, %s37
    %p39 = scmp.eq.s32.totalorder %s13, 0
    %p40 = por %p38, %p39
    %s41 = ssub.s32 %s7, %s14
    %p42 = scmp.eq.s32.totalorder %s41, 0
    %s44 = sadd.s32 %s43, 1
    %s45 = scalar_select %p42, %s43, %s44
    %p48 = pneg %p42
    %p49 = scmp.eq.s32.totalorder %s7, 2
    %p50 = por %p48, %p49
    %p51 = scmp.ne.s32.totalorder %s43, %s46
    %p52 = scmp.eq.s32.totalorder %s7, 0
    %p53 = por %p51, %p52
    %p54 = scmp.ne.s32.totalorder %s43, %s46
    %p55 = scmp.eq.s32.totalorder %s12, 2
    %p56 = por %p54, %p55
    %p57 = scmp.ne.s32.totalorder %s46, %s47
    %p58 = scmp.eq.s32.totalorder %s12, 0
    %p59 = por %p57, %p58
    %p60 = scmp.ne.s32.totalorder %s46, %s47
    %p61 = scmp.eq.s32.totalorder %s13, 2
    %p62 = por %p60, %p61
    %p64 = scmp.ne.s32.totalorder %s47, %s63
    %p65 = scmp.eq.s32.totalorder %s13, 0
    %p66 = por %p64, %p65
    %p67 = scmp.le.s32.totalorder 1, %s7
    %p68 = scmp.lt.s32.totalorder %s7, 4
    %p69 = pnand %p67, %p68
    %p70 = pneg %p69
    // Predicated region
    $region9: #{tpu_custom_call.1} parent=5 // pred_check
      _
    $region10: #{tpu_custom_call.1} parent=5 // pred_check_branch
      %72 = sbr.rel (%p69) target = $region12
    $region11: #{tpu_custom_call.1} parent=5 // pred_region
      %s73 = ssub.s32 %s7, 1
    $region12: #{tpu_custom_call.1} parent=5 // pred_fallthru
      _
    %p74 = scmp.lt.s32.totalorder %s7, 3
    // Predicated region
    $region13: #{tpu_custom_call.1} parent=5 // pred_check
      %p75 = pneg %p74
    $region14: #{tpu_custom_call.1} parent=5 // pred_check_branch
      %77 = sbr.rel (%p75) target = $region16
    $region15: #{tpu_custom_call.1} parent=5 // pred_region
      // Predicated region
      $region17: #{tpu_custom_call.1} parent=15 // pred_check
        %p78 = pneg %p27
      $region18: #{tpu_custom_call.1} parent=15 // pred_check_branch
        %80 = sbr.rel (%p78) target = $region20
      $region19: #{tpu_custom_call.1} parent=15 // pred_region
        %s81 = smul.u32 4, %s7
        %p82 = scmp.lt.s32.totalorder %s81, 11
        %s83 = scalar_select %p82, %s81, 11
        %s84 = smul.addr %s83, 8
        %s85 = scalar_lea.vmem %s0, %s84
        %s86 = smul.u32 4, %s7
      $region20: #{tpu_custom_call.1} parent=15 // pred_fallthru
        _
    $region16: #{tpu_custom_call.1} parent=5 // pred_fallthru
      _
    %p87 = scmp.le.s32.totalorder 1, %s7
    %p88 = scmp.lt.s32.totalorder %s7, 4
    %p89 = pnand %p87, %p88
    %p90 = pneg %p89
    // Predicated region
    $region21: #{tpu_custom_call.1} parent=5 // pred_check
      _
    $region22: #{tpu_custom_call.1} parent=5 // pred_check_branch
      %92 = sbr.rel (%p89) target = $region24
    $region23: #{tpu_custom_call.1} parent=5 // pred_region
      %s93 = ssub.s32 %s7, 1
      %s94 = smul.u32 4, %s12
      %p95 = scmp.lt.s32.totalorder %s94, 11
      %s96 = scalar_select %p95, %s94, 11
      %s97 = smul.addr %s96, 8
      %s98 = scalar_lea.vmem %s0, %s97
      %p99 = pneg %p33
      %p100 = pneg %p30
      %p101 = pneg %p59
      %p102 = pneg %p56
      %s103 = smul.u32 4, %s12
      %p104 = scmp.lt.s32.totalorder %s103, 11
      %s105 = scalar_select %p104, %s103, 11
      %s106 = smul.addr %s105, 8
      %s107 = scalar_lea.vmem %s1, %s106
      %s108 = smul.u32 4, %s12
      %p109 = scmp.lt.s32.totalorder %s108, 11
      %s110 = scalar_select %p109, %s108, 11
      %s111 = smul.addr %s110, 8
      %s112 = scalar_lea.vmem %s0, %s111
      %s113 = smul.u32 4, %s12
      %s114 = smul.u32 4, %s12
      %p115 = scmp.lt.s32.totalorder %s114, 11
      %s116 = scalar_select %p115, %s114, 11
      %s117 = smul.addr %s116, 8
      %s118 = scalar_lea.vmem %s1, %s117
      %s119 = smul.u32 4, %s12
      %v120 = vld [vmem:[%s112] sm:$0xff]
      %v121 = vld [vmem:[%s112 + $0x8] sm:$0xff]
      %v122 = vld [vmem:[%s112 + $0x10] sm:$0xff]
      %v123 = vld [vmem:[%s112 + $0x18] sm:$0xff]
      %v124 = vmul.f32 %v120, %v120
      %v125 = vmul.f32 %v121, %v121
      %v126 = vmul.f32 %v122, %v122
      %v127 = vmul.f32 %v123, %v123
      %vm128 = vcmask 523264
      %v129 = vsel %vm128, %v124, 0.0
      %130 = vadd.xlane.f32.xlu0 %v129
      %v131 = vpop.xlane.xlu0 %130
      %v132 = vsel %vm128, %v125, 0.0
      %133 = vadd.xlane.f32.xlu0 %v132
      %v134 = vpop.xlane.xlu0 %133
      %v135 = vsel %vm128, %v126, 0.0
      %136 = vadd.xlane.f32.xlu0 %v135
      %v137 = vpop.xlane.xlu0 %136
      %v138 = vsel %vm128, %v127, 0.0
      %139 = vadd.xlane.f32.xlu0 %v138
      %v140 = vpop.xlane.xlu0 %139
      %v141 = vadd.f32 %v131, 1e-12
      %v142 = vadd.f32 %v134, 1e-12
      %v143 = vadd.f32 %v137, 1e-12
      %v144 = vadd.f32 %v140, 1e-12
      %v145 = vrsqrt.pop %v141
      %v146 = vrsqrt.pop %v142
      %v147 = vrsqrt.pop %v143
      %v148 = vrsqrt.pop %v144
      %v149 = vmul.f32 %v120, %v145
      %v150 = vmul.f32 %v121, %v146
      %v151 = vmul.f32 %v122, %v147
      %v152 = vmul.f32 %v123, %v148
      %153 = vst.msk [vmem:[%s118] sm:$0xff] %vm128, %v149
      %154 = vst.msk [vmem:[%s118 + $0x8] sm:$0xff] %vm128, %v150
      %155 = vst.msk [vmem:[%s118 + $0x10] sm:$0xff] %vm128, %v151
      %156 = vst.msk [vmem:[%s118 + $0x18] sm:$0xff] %vm128, %v152
      %s157 = smul.u32 4, %s12
      %p158 = scmp.lt.s32.totalorder %s157, 11
      %s159 = scalar_select %p158, %s157, 11
      %s160 = smul.addr %s159, 8
      %s161 = scalar_lea.vmem %s1, %s160
      // Predicated region
      $region25: #{tpu_custom_call.1} parent=23 // pred_check
        %p162 = pneg %p56
      $region26: #{tpu_custom_call.1} parent=23 // pred_check_branch
        %164 = sbr.rel (%p162) target = $region28
      $region27: #{tpu_custom_call.1} parent=23 // pred_region
        %s165 = smul.u32 4, %s12
      $region28: #{tpu_custom_call.1} parent=23 // pred_fallthru
        _
    $region24: #{tpu_custom_call.1} parent=5 // pred_fallthru
      _
    %p166 = scmp.le.s32.totalorder 2, %s7
    // Predicated region
    $region29: #{tpu_custom_call.1} parent=5 // pred_check
      %p167 = pneg %p166
    $region30: #{tpu_custom_call.1} parent=5 // pred_check_branch
      %169 = sbr.rel (%p167) target = $region32
    $region31: #{tpu_custom_call.1} parent=5 // pred_region
      %s170 = ssub.s32 %s7, 2
      // Predicated region
      $region33: #{tpu_custom_call.1} parent=31 // pred_check
        %p171 = pneg %p62
      $region34: #{tpu_custom_call.1} parent=31 // pred_check_branch
        %173 = sbr.rel (%p171) target = $region36
      $region35: #{tpu_custom_call.1} parent=31 // pred_region
        %s174 = smul.u32 4, %s13
        %p175 = scmp.lt.s32.totalorder %s174, 11
        %s176 = scalar_select %p175, %s174, 11
        %s177 = smul.addr %s176, 8
        %s178 = scalar_lea.vmem %s1, %s177
      $region36: #{tpu_custom_call.1} parent=31 // pred_fallthru
        _
    $region32: #{tpu_custom_call.1} parent=5 // pred_fallthru
      _
  $region6: #{tpu_custom_call.1} parent=0 // loop_footer
    %s11 = sadd.s32 1, %s7
  $region7: #{tpu_custom_call.1} parent=0 // loop_footer_branch
    %6 = sbr.rel target = $region3
  $region8: #{tpu_custom_call.1} parent=0 // loop_exit
    _

</llo_original>
